<compile_context>
chip_gen: v5e
topology: v5e:2x2
jax: 0.10.0
libtpu: 0.0.40
codegen_flags: <defaults>
</compile_context>

<pallas_src>
import functools

import jax
import jax.numpy as jnp
from jax.experimental import pallas as pl
from jax.experimental.pallas import tpu as pltpu


_LANE = 128
_SUBLANE = 8
_MAX_BLOCK_BYTES = 2 * 1024 * 1024   # per input block; Pallas double-buffers it
_MAX_TK = 2048                       # lanes consumed per reduction grid step
_PALLAS_MIN_BYTES = 1 << 20          # below this, kernel dispatch overhead dominates


def _round_up(x, m):
    return ((x + m - 1) // m) * m


@functools.lru_cache(maxsize=1)
def _tensorcores_per_chip():
    """2 TensorCores on v4 / v5p / v7x; 1 on v5e / v6e (heuristic, safe default 1)."""
    try:
        kind = jax.devices()[0].device_kind.lower()
    except Exception:
        return 1
    return 2 if any(tag in kind for tag in ("v4", "v5p", "v7")) else 1


def _pick_tiles(rows, hw, itemsize):
    """Row tile (multiple of 8) and lane tile (multiple of 128) with the input
    block capped at ~2 MiB, so double-buffered VMEM stays small on all chips."""
    tk = min(_round_up(hw, _LANE), _MAX_TK)
    max_tr = max(_SUBLANE,
                 (_MAX_BLOCK_BYTES // (tk * itemsize)) // _SUBLANE * _SUBLANE)
    tr = min(_round_up(rows, _SUBLANE), max_tr)
    # Multi-TensorCore chips: make sure the "parallel" row axis has >= 2 grid
    # points so both cores get work. Single-TC chips keep the biggest tile.
    if (_tensorcores_per_chip() >= 2 and rows >= 2 * _SUBLANE
            and pl.cdiv(rows, tr) < 2):
        tr = max(_SUBLANE, _round_up(pl.cdiv(rows, 2), _SUBLANE))
    return tr, tk


def _gap_kernel(x_ref, o_ref, acc_ref, *, tk, hw, inv_hw, need_mask):
    """Global average pool over the lane (last) axis, tiled along it.

    x_ref:   (TR, TK)  rows = flattened (batch, channel); cols = a slice of H*W
    o_ref:   (TR, 1)   per-row mean (written on the last reduction step)
    acc_ref: (TR, 1)   f32 running sum (VMEM scratch)
    """
    k = pl.program_id(1)

    @pl.when(k == 0)
    def _init():
        acc_ref[...] = jnp.zeros_like(acc_ref)

    x = x_ref[...]
    if need_mask:
        # Last HW block is ragged: zero out lanes past the true H*W extent.
        col = k * tk + jax.lax.broadcasted_iota(jnp.int32, x.shape, 1)
        x = jnp.where(col < hw, x, jnp.zeros((), x.dtype))
    # f32 accumulation without materializing a full f32 copy of the tile.
    acc_ref[...] += jnp.sum(x, axis=-1, keepdims=True, dtype=jnp.float32)

    @pl.when(k == pl.num_programs(1) - 1)
    def _store():
        o_ref[...] = (acc_ref[...] * inv_hw).astype(o_ref.dtype)


@jax.jit
def _global_avg_pool_rows(x2d):
    """x2d: (rows, hw) -> (rows,) per-row means via a Pallas TPU kernel."""
    rows, hw = x2d.shape
    tr, tk = _pick_tiles(rows, hw, x2d.dtype.itemsize)
    grid = (pl.cdiv(rows, tr), pl.cdiv(hw, tk))

    kernel = functools.partial(
        _gap_kernel, tk=tk, hw=hw, inv_hw=1.0 / hw, need_mask=(hw % tk != 0))

    out = pl.pallas_call(
        kernel,
        out_shape=jax.ShapeDtypeStruct((rows, 1), x2d.dtype),
        grid_spec=pltpu.PrefetchScalarGridSpec(
            num_scalar_prefetch=0,
            grid=grid,
            in_specs=[pl.BlockSpec((tr, tk), lambda r, k: (r, k))],
            out_specs=pl.BlockSpec((tr, 1), lambda r, k: (r, 0)),
            scratch_shapes=[pltpu.VMEM((tr, 1), jnp.float32)],
        ),
        compiler_params=pltpu.CompilerParams(
            dimension_semantics=("parallel", "arbitrary")),
    )(x2d)
    return out[:, 0]


class AdaptiveAvgParallelPallas:
    """Mirrors AdaptiveAvgParallel(nn.AdaptiveAvgPool2d(1)).

    forward(x_parallel) -> (result, b, c) where result[i] has shape (b, c).
    """

    def __call__(self, x_parallel):
        result = []
        b = c = 0
        for x in x_parallel:
            n, ch, h, w = x.shape
            b, c = n, ch
            if x.size * x.dtype.itemsize < _PALLAS_MIN_BYTES:
                # Tiny pools: pallas_call dispatch + per-step overhead would
                # dominate; a plain fused mean is faster and numerically equal.
                y = jnp.mean(x, axis=(2, 3), dtype=jnp.float32).astype(x.dtype)
            else:
                y = _global_avg_pool_rows(x.reshape(n * ch, h * w)).reshape(n, ch)
            result.append(y)
        return result, b, c


if __name__ == "__main__":
    key = jax.random.PRNGKey(0)
    k0, k1, k2, k3 = jax.random.split(key, 4)

    model = AdaptiveAvgParallelPallas()

    # Small parallel streams (NCHW as PyTorch provides): exercise the
    # tiny-input bypass path.
    x_small = [
        jax.random.normal(k0, (2, 4, 16, 16), dtype=jnp.float32),
        jax.random.normal(k1, (2, 4, 16, 16), dtype=jnp.float32),
    ]
    res_small, b_s, c_s = model(x_small)

    # Larger streams: exercise the Pallas path.  The second has H*W = 10000
    # (not a multiple of 128), exercising HW tiling + ragged-lane masking.
    x_big = [
        jax.random.normal(k2, (2, 64, 48, 48), dtype=jnp.float32),
        jax.random.normal(k3, (2, 32, 100, 100), dtype=jnp.float32),
    ]
    res_big, b_b, c_b = model(x_big)

    for r in res_small + res_big:
        jax.block_until_ready(r)

    # Reference: AdaptiveAvgPool2d(1)(x).view(b, c) == mean over (H, W).
    ok = True
    for xs, rs in ((x_small, res_small), (x_big, res_big)):
        for x, r in zip(xs, rs):
            ref = jnp.mean(x, axis=(2, 3))
            ok = ok and (r.shape == ref.shape)
            ok = ok and bool(jnp.allclose(r, ref, atol=1e-5, rtol=1e-5))

    assert b_s == 2 and c_s == 4
    assert b_b == 2 and c_b == 32
    assert ok

    print("KERNEL_OK")
</pallas_src>

<mosaic_0001>
module attributes {stable_mosaic.version = 11 : i64} {
  func.func @_gap_kernel(%arg0: i32, %arg1: i32, %arg2: memref<128x2048xf32, #tpu.memory_space<vmem>>, %arg3: memref<128x1xf32, #tpu.memory_space<vmem>>, %arg4: memref<128x1xf32, #tpu.memory_space<vmem>>) attributes {dimension_semantics = [#tpu.dimension_semantics<parallel>, #tpu.dimension_semantics<arbitrary>], iteration_bounds = array<i64: 1, 2>, scalar_prefetch = 0 : i64, scratch_operands = 1 : i64, tpu.core_type = #tpu.core_type<tc>, window_params = [{transform_indices = @transform_0, window_bounds = array<i64: 128, 2048>}, {transform_indices = @transform_1, window_bounds = array<i64: 128, 1>}]} {
    %c0_i32 = arith.constant 0 : i32
    %0 = arith.cmpi eq, %arg1, %c0_i32 : i32
    %1 = arith.extui %0 : i1 to i32
    %c0_i32_0 = arith.constant 0 : i32
    %2 = arith.cmpi ne, %1, %c0_i32_0 : i32
    scf.if %2 {
      %cst_8 = arith.constant 0.000000e+00 : f32
      %20 = vector.broadcast %cst_8 : f32 to vector<128x1xf32>
      %c0_9 = arith.constant 0 : index
      %c0_10 = arith.constant 0 : index
      %21 = vector.load %arg4[%c0_9, %c0_10] : memref<128x1xf32, #tpu.memory_space<vmem>>, vector<128x1xf32>
      tpu.vector_store %arg4[%c0_9, %c0_10], %20 {strides = array<i32>} : memref<128x1xf32, #tpu.memory_space<vmem>>, vector<128x1xf32>,
    } else {
    }
    %c0 = arith.constant 0 : index
    %c0_1 = arith.constant 0 : index
    %3 = vector.load %arg2[%c0, %c0_1] : memref<128x2048xf32, #tpu.memory_space<vmem>>, vector<128x2048xf32>
    %c2048_i32 = arith.constant 2048 : i32
    %4 = arith.muli %arg1, %c2048_i32 : i32
    %5 = tpu.iota {dimensions = array<i32: 1>} : vector<128x2048xi32>
    %6 = vector.broadcast %4 : i32 to vector<128x2048xi32>
    %7 = arith.addi %6, %5 : vector<128x2048xi32>
    %c2304_i32 = arith.constant 2304 : i32
    %8 = vector.broadcast %c2304_i32 : i32 to vector<128x2048xi32>
    %9 = arith.cmpi slt, %7, %8 : vector<128x2048xi32>
    %cst = arith.constant 0.000000e+00 : f32
    %10 = vector.broadcast %cst : f32 to vector<128x2048xf32>
    %11 = arith.select %9, %3, %10 : vector<128x2048xi1>, vector<128x2048xf32>
    %c0_2 = arith.constant 0 : index
    %c0_3 = arith.constant 0 : index
    %12 = vector.load %arg4[%c0_2, %c0_3] : memref<128x1xf32, #tpu.memory_space<vmem>>, vector<128x1xf32>
    %cst_4 = arith.constant dense<0.000000e+00> : vector<128xf32>
    %13 = vector.multi_reduction <add>, %11, %cst_4 [1] : vector<128x2048xf32> to vector<128xf32>
    %14 = vector.shape_cast %13 : vector<128xf32> to vector<128x1xf32>
    %15 = arith.addf %12, %14 : vector<128x1xf32>
    %c0_5 = arith.constant 0 : index
    %c0_6 = arith.constant 0 : index
    %16 = vector.load %arg4[%c0_5, %c0_6] : memref<128x1xf32, #tpu.memory_space<vmem>>, vector<128x1xf32>
    tpu.vector_store %arg4[%c0_5, %c0_6], %15 {strides = array<i32>} : memref<128x1xf32, #tpu.memory_space<vmem>>, vector<128x1xf32>,
    %c1_i32 = arith.constant 1 : i32
    %17 = arith.cmpi eq, %arg1, %c1_i32 : i32
    %18 = arith.extui %17 : i1 to i32
    %c0_i32_7 = arith.constant 0 : i32
    %19 = arith.cmpi ne, %18, %c0_i32_7 : i32
    scf.if %19 {
      %c0_8 = arith.constant 0 : index
      %c0_9 = arith.constant 0 : index
      %20 = vector.load %arg4[%c0_8, %c0_9] : memref<128x1xf32, #tpu.memory_space<vmem>>, vector<128x1xf32>
      %cst_10 = arith.constant 4.34027781E-4 : f32
      %21 = vector.broadcast %cst_10 : f32 to vector<128x1xf32>
      %22 = arith.mulf %20, %21 : vector<128x1xf32>
      %c0_11 = arith.constant 0 : index
      %c0_12 = arith.constant 0 : index
      %23 = vector.load %arg3[%c0_11, %c0_12] : memref<128x1xf32, #tpu.memory_space<vmem>>, vector<128x1xf32>
      tpu.vector_store %arg3[%c0_11, %c0_12], %22 {strides = array<i32>} : memref<128x1xf32, #tpu.memory_space<vmem>>, vector<128x1xf32>,
    } else {
    }
    return
  }
  func.func @transform_0(%arg0: i32, %arg1: i32) -> (i32, i32) {
    %c0_i32 = arith.constant 0 : i32
    return %arg0, %arg1 : i32, i32
  }
  func.func @transform_1(%arg0: i32, %arg1: i32) -> (i32, i32) {
    %c0_i32 = arith.constant 0 : i32
    %c0_i32_0 = arith.constant 0 : i32
    return %arg0, %c0_i32 : i32, i32
  }
}

</mosaic_0001>

<llo_original>
// kernel: _global_avg_pool_rows.1
$region0: #{_global_avg_pool_rows.1}
  #allocation0 [shape = 'u32[]', space=smem, size = 0x4, offset = 0x4, fixed_abs, tag = 'smem constant byte address 0x4 - core index']
  #allocation1 [shape = 'u32[72,128]{1,0:T(1,128)}', space=vmem, size = 0x9000, scoped, tag = 'internal scratch']
  #allocation2 [shape = 'f32[128,1]{1,0:T(8,128)}', space=vmem, size = 0x10000, scoped, tag = 'scratch operand']
  %s0 = inlined_call_operand.hbm [shape: f32[128,2304], index: 0, kind: input, shape index: {}]
  %s1 = inlined_call_operand.vmem [shape: f32[128,1], index: 1, kind: output, shape index: {}]
  %s2 = sld [smem:[#allocation0]]
  $region49: #{_global_avg_pool_rows.1} parent=0
    _
  %s4 = ssub.s32 1, %s2
  %s5 = scalar_select 0, %s4, %s2
  $region1: #{_global_avg_pool_rows.1} parent=0
    #allocation3 [shape = 'u8[2097152]{0}', space=vmem, size = 0x200000, scoped, tag = 'input window, operand 0']
    #allocation4 [shape = 's32[2]{0}', space=sflag, size = 0x8, scoped, tag = 'scoped memory for _global_avg_pool_rows.1']
    %6 = vsyncpa [#allocation4], 0
    %s7 = scalar_lea.sflag [#allocation4], 1
    %8 = vsyncpa %s7, 0
    loop: start=0, step=1, limit=4
    $region2: #{_global_avg_pool_rows.1} parent=1 // loop_pre_header
      _
    $region3: #{_global_avg_pool_rows.1} parent=1 // loop_header
      %s10 = sphi 0, %s14
      %p11 = scmp.ge.s32.totalorder %s10, 4
      %s17 = sphi 0, %s29
      %s18 = sphi 0, %s25
      %s19 = sphi 0, %s17
      %s20 = sphi 0, %s18
      %s21 = sphi 0, %s19
      %s22 = sphi 0, %s20
      %s34 = sphi 0, %s36
      %s37 = sphi 0, %s34
      %s38 = sphi 0, %s37
      %s54 = sphi 0, %s38
      %s60 = sphi 0, %s62
      %s63 = sphi 0, %s60
      %s64 = sphi 0, %s63
      %s80 = sphi 0, %s64
    $region4: #{_global_avg_pool_rows.1} parent=1 // loop_header_branch
      %13 = sbr.rel (%p11) target = $region8
    $region5: #{_global_avg_pool_rows.1} parent=1 // loop_body
      %s15 = ssub.s32 %s10, 1
      %s16 = ssub.s32 %s10, 2
      %s23 = sadd.s32 1, %s18
      %p24 = scmp.ge.s32.totalorder %s23, 2
      %s25 = scalar_select %p24, 0, %s23
      %s26 = sadd.s32 1, %s17
      %s27 = scalar_select %p24, %s26, %s17
      %p28 = scmp.ge.s32.totalorder %s27, 1
      %s29 = scalar_select %p28, 0, %s27
      %s30 = ssub.s32 %s17, %s29
      %s31 = ssub.s32 %s18, %s25
      %s32 = sor.u32 %s30, %s31
      %p33 = scmp.eq.s32.totalorder %s32, 0
      %s35 = sadd.s32 %s34, 1
      %s36 = scalar_select %p33, %s34, %s35
      %p39 = pneg %p33
      %p40 = scmp.eq.s32.totalorder %s10, 1
      %p41 = por %p39, %p40
      %p42 = scmp.ne.s32.totalorder %s34, %s37
      %p43 = scmp.eq.s32.totalorder %s10, 0
      %p44 = por %p42, %p43
      %p45 = scmp.ne.s32.totalorder %s34, %s37
      %p46 = scmp.eq.s32.totalorder %s15, 1
      %p47 = por %p45, %p46
      %p48 = scmp.ne.s32.totalorder %s37, %s38
      %p49 = scmp.eq.s32.totalorder %s15, 0
      %p50 = por %p48, %p49
      %p51 = scmp.ne.s32.totalorder %s37, %s38
      %p52 = scmp.eq.s32.totalorder %s16, 1
      %p53 = por %p51, %p52
      %p55 = scmp.ne.s32.totalorder %s38, %s54
      %p56 = scmp.eq.s32.totalorder %s16, 0
      %p57 = por %p55, %p56
      %s58 = ssub.s32 %s17, %s29
      %p59 = scmp.eq.s32.totalorder %s58, 0
      %s61 = sadd.s32 %s60, 1
      %s62 = scalar_select %p59, %s60, %s61
      %p65 = pneg %p59
      %p66 = scmp.eq.s32.totalorder %s10, 1
      %p67 = por %p65, %p66
      %p68 = scmp.ne.s32.totalorder %s60, %s63
      %p69 = scmp.eq.s32.totalorder %s10, 0
      %p70 = por %p68, %p69
      %p71 = scmp.ne.s32.totalorder %s60, %s63
      %p72 = scmp.eq.s32.totalorder %s15, 1
      %p73 = por %p71, %p72
      %p74 = scmp.ne.s32.totalorder %s63, %s64
      %p75 = scmp.eq.s32.totalorder %s15, 0
      %p76 = por %p74, %p75
      %p77 = scmp.ne.s32.totalorder %s63, %s64
      %p78 = scmp.eq.s32.totalorder %s16, 1
      %p79 = por %p77, %p78
      %p81 = scmp.ne.s32.totalorder %s64, %s80
      %p82 = scmp.eq.s32.totalorder %s16, 0
      %p83 = por %p81, %p82
      %p84 = scmp.le.s32.totalorder 1, %s10
      %p85 = scmp.lt.s32.totalorder %s10, 3
      %p86 = pnand %p84, %p85
      %p87 = pneg %p86
      // Predicated region
      $region9: #{_global_avg_pool_rows.1} parent=5 // pred_check
        _
      $region10: #{_global_avg_pool_rows.1} parent=5 // pred_check_branch
        %89 = sbr.rel (%p86) target = $region12
      $region11: #{_global_avg_pool_rows.1} parent=5 // pred_region
        %s90 = ssub.s32 %s10, 1
      $region12: #{_global_avg_pool_rows.1} parent=5 // pred_fallthru
        _
      %p91 = scmp.lt.s32.totalorder %s10, 2
      // Predicated region
      $region13: #{_global_avg_pool_rows.1} parent=5 // pred_check
        %p92 = pneg %p91
      $region14: #{_global_avg_pool_rows.1} parent=5 // pred_check_branch
        %94 = sbr.rel (%p92) target = $region16
      $region15: #{_global_avg_pool_rows.1} parent=5 // pred_region
        // Predicated region
        $region17: #{_global_avg_pool_rows.1} parent=15 // pred_check
          %p95 = pneg %p44
        $region18: #{_global_avg_pool_rows.1} parent=15 // pred_check_branch
          %97 = sbr.rel (%p95) target = $region20
        $region19: #{_global_avg_pool_rows.1} parent=15 // pred_region
          %s98 = sand.u32 %s34, 1
          %s99 = scalar_lea.sflag [#allocation4], %s98
          %s100 = sand.u32 %s34, 1
          %s101 = smul.addr %s100, 2048
          %s102 = scalar_lea.vmem [#allocation3], %s101
          %s103 = smul.u32 16, %s17
          %s104 = smul.u32 16, %s18
          %s105 = ssub.s32 18, %s104
          %p106 = scmp.lt.s32.totalorder %s105, 16
          %s107 = scalar_select %p106, %s105, 16
          %s108 = smul.u32 128, %s107
          %s109 = ssub.s32 2048, %s108
          %s110 = sshll.u32 %s109, 4
          %111 = vsyncadd %s99, %s110
          %p112 = scmp.ne.s32.totalorder 0, %s108
          %s113 = smul.addr %s103, 18
          %s114 = sadd.s32 %s104, %s113
          %s115 = smul.addr %s114, 8
          %s116 = scalar_lea.hbm %s0, %s115
          %s117 = smul.u32 %s107, 8
          %s118 = smul.u32 %s117, 16
          %s119 = sshll.u32 %s116, 4
          %s120 = int_to_ptr.hbm [resolvable:$true] %s119
          %s121 = sshll.u32 %s102, 4
          %s122 = int_to_ptr.vmem [resolvable:$true] %s121
          %s123 = sshll.u32 %s118, 4
          %127 = dma.hbm_to_vmem [thread:$0]  (%p112), %s120, %s123, %s122, %s99, 2304, 2048, %s117
        $region20: #{_global_avg_pool_rows.1} parent=15 // pred_fallthru
          _
      $region16: #{_global_avg_pool_rows.1} parent=5 // pred_fallthru
        _
      %p128 = scmp.le.s32.totalorder 1, %s10
      %p129 = scmp.lt.s32.totalorder %s10, 3
      %p130 = pnand %p128, %p129
      %p131 = pneg %p130
      // Predicated region
      $region21: #{_global_avg_pool_rows.1} parent=5 // pred_check
        _
      $region22: #{_global_avg_pool_rows.1} parent=5 // pred_check_branch
        %133 = sbr.rel (%p130) target = $region24
      $region23: #{_global_avg_pool_rows.1} parent=5 // pred_region
        %s134 = ssub.s32 %s10, 1
        %s135 = sand.u32 %s37, 1
        %s136 = scalar_lea.sflag [#allocation4], %s135
        %s137 = sand.u32 %s37, 1
        %s138 = smul.addr %s137, 2048
        %s139 = scalar_lea.vmem [#allocation3], %s138
        // Predicated region
        $region25: #{_global_avg_pool_rows.1} parent=23 // pred_check
          %p140 = pneg %p50
        $region26: #{_global_avg_pool_rows.1} parent=23 // pred_check_branch
          %142 = sbr.rel (%p140) target = $region28
        $region27: #{_global_avg_pool_rows.1} parent=23 // pred_region
          %144 = dma.done %s136, 32768
        $region28: #{_global_avg_pool_rows.1} parent=23 // pred_fallthru
          _
        %s145 = sand.u32 %s37, 1
        %s146 = scalar_lea.sflag [#allocation4], %s145
        %s147 = sand.u32 %s37, 1
        %s148 = smul.addr %s147, 2048
        %s149 = scalar_lea.vmem [#allocation3], %s148
        %p150 = pneg %p50
        %p151 = pneg %p47
        %p152 = pneg %p76
        %p153 = pneg %p73
        %s154 = smul.u32 16, %s19
        %p155 = scmp.lt.s32.totalorder %s154, 15
        %s156 = scalar_select %p155, %s154, 15
        %s157 = smul.addr %s156, 8
        %s158 = scalar_lea.vmem %s1, %s157
        %s159 = smul.u32 16, %s19
        %s160 = smul.u32 16, %s20
        %s161 = ssub.s32 18, %s160
        %p162 = scmp.lt.s32.totalorder %s161, 16
        %s163 = scalar_select %p162, %s161, 16
        %s164 = smul.u32 128, %s163
        %s165 = smul.u32 16, %s19
        %p166 = scmp.lt.s32.totalorder %s165, 15
        %s167 = scalar_select %p166, %s165, 15
        %s168 = smul.addr %s167, 8
        %s169 = scalar_lea.vmem %s1, %s168
        %s170 = smul.u32 16, %s19
        %p171 = scmp.eq.s32.totalorder %s20, 0
        // Predicated region
        $region29: #{_global_avg_pool_rows.1} parent=23 // pred_check
          %p172 = pneg %p171
        $region30: #{_global_avg_pool_rows.1} parent=23 // pred_check_branch
          %174 = sbr.rel (%p172) target = $region32
        $region31: #{_global_avg_pool_rows.1} parent=23 // pred_region
          %vm175 = vcmask 7168
          %176 = vst.msk [vmem:[#allocation2] sm:$0xff] %vm175, 0.0
          %177 = vst.msk [vmem:[#allocation2 + $0x8] sm:$0xff] %vm175, 0.0
          %178 = vst.msk [vmem:[#allocation2 + $0x10] sm:$0xff] %vm175, 0.0
          %179 = vst.msk [vmem:[#allocation2 + $0x18] sm:$0xff] %vm175, 0.0
          %180 = vst.msk [vmem:[#allocation2 + $0x20] sm:$0xff] %vm175, 0.0
          %181 = vst.msk [vmem:[#allocation2 + $0x28] sm:$0xff] %vm175, 0.0
          %182 = vst.msk [vmem:[#allocation2 + $0x30] sm:$0xff] %vm175, 0.0
          %183 = vst.msk [vmem:[#allocation2 + $0x38] sm:$0xff] %vm175, 0.0
          %184 = vst.msk [vmem:[#allocation2 + $0x40] sm:$0xff] %vm175, 0.0
          %185 = vst.msk [vmem:[#allocation2 + $0x48] sm:$0xff] %vm175, 0.0
          %186 = vst.msk [vmem:[#allocation2 + $0x50] sm:$0xff] %vm175, 0.0
          %187 = vst.msk [vmem:[#allocation2 + $0x58] sm:$0xff] %vm175, 0.0
          %188 = vst.msk [vmem:[#allocation2 + $0x60] sm:$0xff] %vm175, 0.0
          %189 = vst.msk [vmem:[#allocation2 + $0x68] sm:$0xff] %vm175, 0.0
          %190 = vst.msk [vmem:[#allocation2 + $0x70] sm:$0xff] %vm175, 0.0
          %191 = vst.msk [vmem:[#allocation2 + $0x78] sm:$0xff] %vm175, 0.0
        $region32: #{_global_avg_pool_rows.1} parent=23 // pred_fallthru
          _
        %v192 = vld [vmem:[%s139] sm:$0xff]
        %v193 = vld [vmem:[%s139 + $0x8] sm:$0xff]
        %v194 = vld [vmem:[%s139 + $0x10] sm:$0xff]
        %v195 = vld [vmem:[%s139 + $0x18] sm:$0xff]
        %v196 = vld [vmem:[%s139 + $0x20] sm:$0xff]
        %v197 = vld [vmem:[%s139 + $0x28] sm:$0xff]
        %v198 = vld [vmem:[%s139 + $0x30] sm:$0xff]
        %v199 = vld [vmem:[%s139 + $0x38] sm:$0xff]
        %v200 = vld [vmem:[%s139 + $0x40] sm:$0xff]
        %v201 = vld [vmem:[%s139 + $0x48] sm:$0xff]
        %v202 = vld [vmem:[%s139 + $0x50] sm:$0xff]
        %v203 = vld [vmem:[%s139 + $0x58] sm:$0xff]
        %v204 = vld [vmem:[%s139 + $0x60] sm:$0xff]
        %v205 = vld [vmem:[%s139 + $0x68] sm:$0xff]
        %v206 = vld [vmem:[%s139 + $0x70] sm:$0xff]
        %v207 = vld [vmem:[%s139 + $0x78] sm:$0xff]
        %v208 = vld [vmem:[%s139 + $0x80] sm:$0xff]
        %v209 = vld [vmem:[%s139 + $0x88] sm:$0xff]
        %v210 = vld [vmem:[%s139 + $0x90] sm:$0xff]
        %v211 = vld [vmem:[%s139 + $0x98] sm:$0xff]
        %v212 = vld [vmem:[%s139 + $0xa0] sm:$0xff]
        %v213 = vld [vmem:[%s139 + $0xa8] sm:$0xff]
        %v214 = vld [vmem:[%s139 + $0xb0] sm:$0xff]
        %v215 = vld [vmem:[%s139 + $0xb8] sm:$0xff]
        %v216 = vld [vmem:[%s139 + $0xc0] sm:$0xff]
        %v217 = vld [vmem:[%s139 + $0xc8] sm:$0xff]
        %v218 = vld [vmem:[%s139 + $0xd0] sm:$0xff]
        %v219 = vld [vmem:[%s139 + $0xd8] sm:$0xff]
        %v220 = vld [vmem:[%s139 + $0xe0] sm:$0xff]
        %v221 = vld [vmem:[%s139 + $0xe8] sm:$0xff]
        %v222 = vld [vmem:[%s139 + $0xf0] sm:$0xff]
        %v223 = vld [vmem:[%s139 + $0xf8] sm:$0xff]
        %v224 = vld [vmem:[%s139 + $0x100] sm:$0xff]
        %v225 = vld [vmem:[%s139 + $0x108] sm:$0xff]
        %v226 = vld [vmem:[%s139 + $0x110] sm:$0xff]
        %v227 = vld [vmem:[%s139 + $0x118] sm:$0xff]
        %v228 = vld [vmem:[%s139 + $0x120] sm:$0xff]
        %v229 = vld [vmem:[%s139 + $0x128] sm:$0xff]
        %v230 = vld [vmem:[%s139 + $0x130] sm:$0xff]
        %v231 = vld [vmem:[%s139 + $0x138] sm:$0xff]
        %v232 = vld [vmem:[%s139 + $0x140] sm:$0xff]
        %v233 = vld [vmem:[%s139 + $0x148] sm:$0xff]
        %v234 = vld [vmem:[%s139 + $0x150] sm:$0xff]
        %v235 = vld [vmem:[%s139 + $0x158] sm:$0xff]
        %v236 = vld [vmem:[%s139 + $0x160] sm:$0xff]
        %v237 = vld [vmem:[%s139 + $0x168] sm:$0xff]
        %v238 = vld [vmem:[%s139 + $0x170] sm:$0xff]
        %v239 = vld [vmem:[%s139 + $0x178] sm:$0xff]
        %v240 = vld [vmem:[%s139 + $0x180] sm:$0xff]
        %v241 = vld [vmem:[%s139 + $0x188] sm:$0xff]
        %v242 = vld [vmem:[%s139 + $0x190] sm:$0xff]
        %v243 = vld [vmem:[%s139 + $0x198] sm:$0xff]
        %v244 = vld [vmem:[%s139 + $0x1a0] sm:$0xff]
        %v245 = vld [vmem:[%s139 + $0x1a8] sm:$0xff]
        %v246 = vld [vmem:[%s139 + $0x1b0] sm:$0xff]
        %v247 = vld [vmem:[%s139 + $0x1b8] sm:$0xff]
        %v248 = vld [vmem:[%s139 + $0x1c0] sm:$0xff]
        %v249 = vld [vmem:[%s139 + $0x1c8] sm:$0xff]
        %v250 = vld [vmem:[%s139 + $0x1d0] sm:$0xff]
        %v251 = vld [vmem:[%s139 + $0x1d8] sm:$0xff]
        %v252 = vld [vmem:[%s139 + $0x1e0] sm:$0xff]
        %v253 = vld [vmem:[%s139 + $0x1e8] sm:$0xff]
        %v254 = vld [vmem:[%s139 + $0x1f0] sm:$0xff]
        %v255 = vld [vmem:[%s139 + $0x1f8] sm:$0xff]
        %v256 = vld [vmem:[%s139 + $0x200] sm:$0xff]
        %v257 = vld [vmem:[%s139 + $0x208] sm:$0xff]
        %v258 = vld [vmem:[%s139 + $0x210] sm:$0xff]
        %v259 = vld [vmem:[%s139 + $0x218] sm:$0xff]
        %v260 = vld [vmem:[%s139 + $0x220] sm:$0xff]
        %v261 = vld [vmem:[%s139 + $0x228] sm:$0xff]
        %v262 = vld [vmem:[%s139 + $0x230] sm:$0xff]
        %v263 = vld [vmem:[%s139 + $0x238] sm:$0xff]
        %v264 = vld [vmem:[%s139 + $0x240] sm:$0xff]
        %v265 = vld [vmem:[%s139 + $0x248] sm:$0xff]
        %v266 = vld [vmem:[%s139 + $0x250] sm:$0xff]
        %v267 = vld [vmem:[%s139 + $0x258] sm:$0xff]
        %v268 = vld [vmem:[%s139 + $0x260] sm:$0xff]
        %v269 = vld [vmem:[%s139 + $0x268] sm:$0xff]
        %v270 = vld [vmem:[%s139 + $0x270] sm:$0xff]
        %v271 = vld [vmem:[%s139 + $0x278] sm:$0xff]
        %v272 = vld [vmem:[%s139 + $0x280] sm:$0xff]
        %v273 = vld [vmem:[%s139 + $0x288] sm:$0xff]
        %v274 = vld [vmem:[%s139 + $0x290] sm:$0xff]
        %v275 = vld [vmem:[%s139 + $0x298] sm:$0xff]
        %v276 = vld [vmem:[%s139 + $0x2a0] sm:$0xff]
        %v277 = vld [vmem:[%s139 + $0x2a8] sm:$0xff]
        %v278 = vld [vmem:[%s139 + $0x2b0] sm:$0xff]
        %v279 = vld [vmem:[%s139 + $0x2b8] sm:$0xff]
        %v280 = vld [vmem:[%s139 + $0x2c0] sm:$0xff]
        %v281 = vld [vmem:[%s139 + $0x2c8] sm:$0xff]
        %v282 = vld [vmem:[%s139 + $0x2d0] sm:$0xff]
        %v283 = vld [vmem:[%s139 + $0x2d8] sm:$0xff]
        %v284 = vld [vmem:[%s139 + $0x2e0] sm:$0xff]
        %v285 = vld [vmem:[%s139 + $0x2e8] sm:$0xff]
        %v286 = vld [vmem:[%s139 + $0x2f0] sm:$0xff]
        %v287 = vld [vmem:[%s139 + $0x2f8] sm:$0xff]
        %v288 = vld [vmem:[%s139 + $0x300] sm:$0xff]
        %v289 = vld [vmem:[%s139 + $0x308] sm:$0xff]
        %v290 = vld [vmem:[%s139 + $0x310] sm:$0xff]
        %v291 = vld [vmem:[%s139 + $0x318] sm:$0xff]
        %v292 = vld [vmem:[%s139 + $0x320] sm:$0xff]
        %v293 = vld [vmem:[%s139 + $0x328] sm:$0xff]
        %v294 = vld [vmem:[%s139 + $0x330] sm:$0xff]
        %v295 = vld [vmem:[%s139 + $0x338] sm:$0xff]
        %v296 = vld [vmem:[%s139 + $0x340] sm:$0xff]
        %v297 = vld [vmem:[%s139 + $0x348] sm:$0xff]
        %v298 = vld [vmem:[%s139 + $0x350] sm:$0xff]
        %v299 = vld [vmem:[%s139 + $0x358] sm:$0xff]
        %v300 = vld [vmem:[%s139 + $0x360] sm:$0xff]
        %v301 = vld [vmem:[%s139 + $0x368] sm:$0xff]
        %v302 = vld [vmem:[%s139 + $0x370] sm:$0xff]
        %v303 = vld [vmem:[%s139 + $0x378] sm:$0xff]
        %v304 = vld [vmem:[%s139 + $0x380] sm:$0xff]
        %v305 = vld [vmem:[%s139 + $0x388] sm:$0xff]
        %v306 = vld [vmem:[%s139 + $0x390] sm:$0xff]
        %v307 = vld [vmem:[%s139 + $0x398] sm:$0xff]
        %v308 = vld [vmem:[%s139 + $0x3a0] sm:$0xff]
        %v309 = vld [vmem:[%s139 + $0x3a8] sm:$0xff]
        %v310 = vld [vmem:[%s139 + $0x3b0] sm:$0xff]
        %v311 = vld [vmem:[%s139 + $0x3b8] sm:$0xff]
        %v312 = vld [vmem:[%s139 + $0x3c0] sm:$0xff]
        %v313 = vld [vmem:[%s139 + $0x3c8] sm:$0xff]
        %v314 = vld [vmem:[%s139 + $0x3d0] sm:$0xff]
        %v315 = vld [vmem:[%s139 + $0x3d8] sm:$0xff]
        %v316 = vld [vmem:[%s139 + $0x3e0] sm:$0xff]
        %v317 = vld [vmem:[%s139 + $0x3e8] sm:$0xff]
        %v318 = vld [vmem:[%s139 + $0x3f0] sm:$0xff]
        %v319 = vld [vmem:[%s139 + $0x3f8] sm:$0xff]
        %v320 = vld [vmem:[%s139 + $0x400] sm:$0xff]
        %v321 = vld [vmem:[%s139 + $0x408] sm:$0xff]
        %v322 = vld [vmem:[%s139 + $0x410] sm:$0xff]
        %v323 = vld [vmem:[%s139 + $0x418] sm:$0xff]
        %v324 = vld [vmem:[%s139 + $0x420] sm:$0xff]
        %v325 = vld [vmem:[%s139 + $0x428] sm:$0xff]
        %v326 = vld [vmem:[%s139 + $0x430] sm:$0xff]
        %v327 = vld [vmem:[%s139 + $0x438] sm:$0xff]
        %v328 = vld [vmem:[%s139 + $0x440] sm:$0xff]
        %v329 = vld [vmem:[%s139 + $0x448] sm:$0xff]
        %v330 = vld [vmem:[%s139 + $0x450] sm:$0xff]
        %v331 = vld [vmem:[%s139 + $0x458] sm:$0xff]
        %v332 = vld [vmem:[%s139 + $0x460] sm:$0xff]
        %v333 = vld [vmem:[%s139 + $0x468] sm:$0xff]
        %v334 = vld [vmem:[%s139 + $0x470] sm:$0xff]
        %v335 = vld [vmem:[%s139 + $0x478] sm:$0xff]
        %v336 = vld [vmem:[%s139 + $0x480] sm:$0xff]
        %v337 = vld [vmem:[%s139 + $0x488] sm:$0xff]
        %v338 = vld [vmem:[%s139 + $0x490] sm:$0xff]
        %v339 = vld [vmem:[%s139 + $0x498] sm:$0xff]
        %v340 = vld [vmem:[%s139 + $0x4a0] sm:$0xff]
        %v341 = vld [vmem:[%s139 + $0x4a8] sm:$0xff]
        %v342 = vld [vmem:[%s139 + $0x4b0] sm:$0xff]
        %v343 = vld [vmem:[%s139 + $0x4b8] sm:$0xff]
        %v344 = vld [vmem:[%s139 + $0x4c0] sm:$0xff]
        %v345 = vld [vmem:[%s139 + $0x4c8] sm:$0xff]
        %v346 = vld [vmem:[%s139 + $0x4d0] sm:$0xff]
        %v347 = vld [vmem:[%s139 + $0x4d8] sm:$0xff]
        %v348 = vld [vmem:[%s139 + $0x4e0] sm:$0xff]
        %v349 = vld [vmem:[%s139 + $0x4e8] sm:$0xff]
        %v350 = vld [vmem:[%s139 + $0x4f0] sm:$0xff]
        %v351 = vld [vmem:[%s139 + $0x4f8] sm:$0xff]
        %v352 = vld [vmem:[%s139 + $0x500] sm:$0xff]
        %v353 = vld [vmem:[%s139 + $0x508] sm:$0xff]
        %v354 = vld [vmem:[%s139 + $0x510] sm:$0xff]
        %v355 = vld [vmem:[%s139 + $0x518] sm:$0xff]
        %v356 = vld [vmem:[%s139 + $0x520] sm:$0xff]
        %v357 = vld [vmem:[%s139 + $0x528] sm:$0xff]
        %v358 = vld [vmem:[%s139 + $0x530] sm:$0xff]
        %v359 = vld [vmem:[%s139 + $0x538] sm:$0xff]
        %v360 = vld [vmem:[%s139 + $0x540] sm:$0xff]
        %v361 = vld [vmem:[%s139 + $0x548] sm:$0xff]
        %v362 = vld [vmem:[%s139 + $0x550] sm:$0xff]
        %v363 = vld [vmem:[%s139 + $0x558] sm:$0xff]
        %v364 = vld [vmem:[%s139 + $0x560] sm:$0xff]
        %v365 = vld [vmem:[%s139 + $0x568] sm:$0xff]
        %v366 = vld [vmem:[%s139 + $0x570] sm:$0xff]
        %v367 = vld [vmem:[%s139 + $0x578] sm:$0xff]
        %v368 = vld [vmem:[%s139 + $0x580] sm:$0xff]
        %v369 = vld [vmem:[%s139 + $0x588] sm:$0xff]
        %v370 = vld [vmem:[%s139 + $0x590] sm:$0xff]
        %v371 = vld [vmem:[%s139 + $0x598] sm:$0xff]
        %v372 = vld [vmem:[%s139 + $0x5a0] sm:$0xff]
        %v373 = vld [vmem:[%s139 + $0x5a8] sm:$0xff]
        %v374 = vld [vmem:[%s139 + $0x5b0] sm:$0xff]
        %v375 = vld [vmem:[%s139 + $0x5b8] sm:$0xff]
        %v376 = vld [vmem:[%s139 + $0x5c0] sm:$0xff]
        %v377 = vld [vmem:[%s139 + $0x5c8] sm:$0xff]
        %v378 = vld [vmem:[%s139 + $0x5d0] sm:$0xff]
        %v379 = vld [vmem:[%s139 + $0x5d8] sm:$0xff]
        %v380 = vld [vmem:[%s139 + $0x5e0] sm:$0xff]
        %v381 = vld [vmem:[%s139 + $0x5e8] sm:$0xff]
        %v382 = vld [vmem:[%s139 + $0x5f0] sm:$0xff]
        %v383 = vld [vmem:[%s139 + $0x5f8] sm:$0xff]
        %v384 = vld [vmem:[%s139 + $0x600] sm:$0xff]
        %v385 = vld [vmem:[%s139 + $0x608] sm:$0xff]
        %v386 = vld [vmem:[%s139 + $0x610] sm:$0xff]
        %v387 = vld [vmem:[%s139 + $0x618] sm:$0xff]
        %v388 = vld [vmem:[%s139 + $0x620] sm:$0xff]
        %v389 = vld [vmem:[%s139 + $0x628] sm:$0xff]
        %v390 = vld [vmem:[%s139 + $0x630] sm:$0xff]
        %v391 = vld [vmem:[%s139 + $0x638] sm:$0xff]
        %v392 = vld [vmem:[%s139 + $0x640] sm:$0xff]
        %v393 = vld [vmem:[%s139 + $0x648] sm:$0xff]
        %v394 = vld [vmem:[%s139 + $0x650] sm:$0xff]
        %v395 = vld [vmem:[%s139 + $0x658] sm:$0xff]
        %v396 = vld [vmem:[%s139 + $0x660] sm:$0xff]
        %v397 = vld [vmem:[%s139 + $0x668] sm:$0xff]
        %v398 = vld [vmem:[%s139 + $0x670] sm:$0xff]
        %v399 = vld [vmem:[%s139 + $0x678] sm:$0xff]
        %v400 = vld [vmem:[%s139 + $0x680] sm:$0xff]
        %v401 = vld [vmem:[%s139 + $0x688] sm:$0xff]
        %v402 = vld [vmem:[%s139 + $0x690] sm:$0xff]
        %v403 = vld [vmem:[%s139 + $0x698] sm:$0xff]
        %v404 = vld [vmem:[%s139 + $0x6a0] sm:$0xff]
        %v405 = vld [vmem:[%s139 + $0x6a8] sm:$0xff]
        %v406 = vld [vmem:[%s139 + $0x6b0] sm:$0xff]
        %v407 = vld [vmem:[%s139 + $0x6b8] sm:$0xff]
        %v408 = vld [vmem:[%s139 + $0x6c0] sm:$0xff]
        %v409 = vld [vmem:[%s139 + $0x6c8] sm:$0xff]
        %v410 = vld [vmem:[%s139 + $0x6d0] sm:$0xff]
        %v411 = vld [vmem:[%s139 + $0x6d8] sm:$0xff]
        %v412 = vld [vmem:[%s139 + $0x6e0] sm:$0xff]
        %v413 = vld [vmem:[%s139 + $0x6e8] sm:$0xff]
        %v414 = vld [vmem:[%s139 + $0x6f0] sm:$0xff]
        %v415 = vld [vmem:[%s139 + $0x6f8] sm:$0xff]
        %v416 = vld [vmem:[%s139 + $0x700] sm:$0xff]
        %v417 = vld [vmem:[%s139 + $0x708] sm:$0xff]
        %v418 = vld [vmem:[%s139 + $0x710] sm:$0xff]
        %v419 = vld [vmem:[%s139 + $0x718] sm:$0xff]
        %v420 = vld [vmem:[%s139 + $0x720] sm:$0xff]
        %v421 = vld [vmem:[%s139 + $0x728] sm:$0xff]
        %v422 = vld [vmem:[%s139 + $0x730] sm:$0xff]
        %v423 = vld [vmem:[%s139 + $0x738] sm:$0xff]
        %v424 = vld [vmem:[%s139 + $0x740] sm:$0xff]
        %v425 = vld [vmem:[%s139 + $0x748] sm:$0xff]
        %v426 = vld [vmem:[%s139 + $0x750] sm:$0xff]
        %v427 = vld [vmem:[%s139 + $0x758] sm:$0xff]
        %v428 = vld [vmem:[%s139 + $0x760] sm:$0xff]
        %v429 = vld [vmem:[%s139 + $0x768] sm:$0xff]
        %v430 = vld [vmem:[%s139 + $0x770] sm:$0xff]
        %v431 = vld [vmem:[%s139 + $0x778] sm:$0xff]
        %v432 = vld [vmem:[%s139 + $0x780] sm:$0xff]
        %v433 = vld [vmem:[%s139 + $0x788] sm:$0xff]
        %v434 = vld [vmem:[%s139 + $0x790] sm:$0xff]
        %v435 = vld [vmem:[%s139 + $0x798] sm:$0xff]
        %v436 = vld [vmem:[%s139 + $0x7a0] sm:$0xff]
        %v437 = vld [vmem:[%s139 + $0x7a8] sm:$0xff]
        %v438 = vld [vmem:[%s139 + $0x7b0] sm:$0xff]
        %v439 = vld [vmem:[%s139 + $0x7b8] sm:$0xff]
        %v440 = vld [vmem:[%s139 + $0x7c0] sm:$0xff]
        %v441 = vld [vmem:[%s139 + $0x7c8] sm:$0xff]
        %v442 = vld [vmem:[%s139 + $0x7d0] sm:$0xff]
        %v443 = vld [vmem:[%s139 + $0x7d8] sm:$0xff]
        %v444 = vld [vmem:[%s139 + $0x7e0] sm:$0xff]
        %v445 = vld [vmem:[%s139 + $0x7e8] sm:$0xff]
        %v446 = vld [vmem:[%s139 + $0x7f0] sm:$0xff]
        %v447 = vld [vmem:[%s139 + $0x7f8] sm:$0xff]
        %s448 = smul.u32 %s20, 2048
        %v449 = vlaneseq
        %v450 = vand.u32 %v449, 127
        %v451 = vadd.s32 %v450, 128
        %v452 = vadd.s32 %v450, 256
        %v453 = vadd.s32 %v450, 384
        %v454 = vadd.s32 %v450, 512
        %v455 = vadd.s32 %v450, 640
        %v456 = vadd.s32 %v450, 768
        %v457 = vadd.s32 %v450, 896
        %v458 = vadd.s32 %v450, 1024
        %v459 = vadd.s32 %v450, 1152
        %v460 = vadd.s32 %v450, 1280
        %v461 = vadd.s32 %v450, 1408
        %v462 = vadd.s32 %v450, 1536
        %v463 = vadd.s32 %v450, 1664
        %v464 = vadd.s32 %v450, 1792
        %v465 = vadd.s32 %v450, 1920
        %v466 = vstv %s448
        %v467 = vadd.s32 %v466, %v450
        %v468 = vadd.s32 %v466, %v451
        %v469 = vadd.s32 %v466, %v452
        %v470 = vadd.s32 %v466, %v453
        %v471 = vadd.s32 %v466, %v454
        %v472 = vadd.s32 %v466, %v455
        %v473 = vadd.s32 %v466, %v456
        %v474 = vadd.s32 %v466, %v457
        %v475 = vadd.s32 %v466, %v458
        %v476 = vadd.s32 %v466, %v459
        %v477 = vadd.s32 %v466, %v460
        %v478 = vadd.s32 %v466, %v461
        %v479 = vadd.s32 %v466, %v462
        %v480 = vadd.s32 %v466, %v463
        %v481 = vadd.s32 %v466, %v464
        %v482 = vadd.s32 %v466, %v465
        %vm483 = vcmp.lt.s32.totalorder %v467, 2304
        %vm484 = vcmp.lt.s32.totalorder %v468, 2304
        %vm485 = vcmp.lt.s32.totalorder %v469, 2304
        %vm486 = vcmp.lt.s32.totalorder %v470, 2304
        %vm487 = vcmp.lt.s32.totalorder %v471, 2304
        %vm488 = vcmp.lt.s32.totalorder %v472, 2304
        %vm489 = vcmp.lt.s32.totalorder %v473, 2304
        %vm490 = vcmp.lt.s32.totalorder %v474, 2304
        %vm491 = vcmp.lt.s32.totalorder %v475, 2304
        %vm492 = vcmp.lt.s32.totalorder %v476, 2304
        %vm493 = vcmp.lt.s32.totalorder %v477, 2304
        %vm494 = vcmp.lt.s32.totalorder %v478, 2304
        %vm495 = vcmp.lt.s32.totalorder %v479, 2304
        %vm496 = vcmp.lt.s32.totalorder %v480, 2304
        %vm497 = vcmp.lt.s32.totalorder %v481, 2304
        %vm498 = vcmp.lt.s32.totalorder %v482, 2304
        %v499 = vsel %vm483, %v192, 0.0
        %v500 = vsel %vm484, %v193, 0.0
        %v501 = vsel %vm485, %v194, 0.0
        %v502 = vsel %vm486, %v195, 0.0
        %v503 = vsel %vm487, %v196, 0.0
        %v504 = vsel %vm488, %v197, 0.0
        %v505 = vsel %vm489, %v198, 0.0
        %v506 = vsel %vm490, %v199, 0.0
        %v507 = vsel %vm491, %v200, 0.0
        %v508 = vsel %vm492, %v201, 0.0
        %v509 = vsel %vm493, %v202, 0.0
        %v510 = vsel %vm494, %v203, 0.0
        %v511 = vsel %vm495, %v204, 0.0
        %v512 = vsel %vm496, %v205, 0.0
        %v513 = vsel %vm497, %v206, 0.0
        %v514 = vsel %vm498, %v207, 0.0
        %v515 = vsel %vm483, %v208, 0.0
        %v516 = vsel %vm484, %v209, 0.0
        %v517 = vsel %vm485, %v210, 0.0
        %v518 = vsel %vm486, %v211, 0.0
        %v519 = vsel %vm487, %v212, 0.0
        %v520 = vsel %vm488, %v213, 0.0
        %v521 = vsel %vm489, %v214, 0.0
        %v522 = vsel %vm490, %v215, 0.0
        %v523 = vsel %vm491, %v216, 0.0
        %v524 = vsel %vm492, %v217, 0.0
        %v525 = vsel %vm493, %v218, 0.0
        %v526 = vsel %vm494, %v219, 0.0
        %v527 = vsel %vm495, %v220, 0.0
        %v528 = vsel %vm496, %v221, 0.0
        %v529 = vsel %vm497, %v222, 0.0
        %v530 = vsel %vm498, %v223, 0.0
        %v531 = vsel %vm483, %v224, 0.0
        %v532 = vsel %vm484, %v225, 0.0
        %v533 = vsel %vm485, %v226, 0.0
        %v534 = vsel %vm486, %v227, 0.0
        %v535 = vsel %vm487, %v228, 0.0
        %v536 = vsel %vm488, %v229, 0.0
        %v537 = vsel %vm489, %v230, 0.0
        %v538 = vsel %vm490, %v231, 0.0
        %v539 = vsel %vm491, %v232, 0.0
        %v540 = vsel %vm492, %v233, 0.0
        %v541 = vsel %vm493, %v234, 0.0
        %v542 = vsel %vm494, %v235, 0.0
        %v543 = vsel %vm495, %v236, 0.0
        %v544 = vsel %vm496, %v237, 0.0
        %v545 = vsel %vm497, %v238, 0.0
        %v546 = vsel %vm498, %v239, 0.0
        %v547 = vsel %vm483, %v240, 0.0
        %v548 = vsel %vm484, %v241, 0.0
        %v549 = vsel %vm485, %v242, 0.0
        %v550 = vsel %vm486, %v243, 0.0
        %v551 = vsel %vm487, %v244, 0.0
        %v552 = vsel %vm488, %v245, 0.0
        %v553 = vsel %vm489, %v246, 0.0
        %v554 = vsel %vm490, %v247, 0.0
        %v555 = vsel %vm491, %v248, 0.0
        %v556 = vsel %vm492, %v249, 0.0
        %v557 = vsel %vm493, %v250, 0.0
        %v558 = vsel %vm494, %v251, 0.0
        %v559 = vsel %vm495, %v252, 0.0
        %v560 = vsel %vm496, %v253, 0.0
        %v561 = vsel %vm497, %v254, 0.0
        %v562 = vsel %vm498, %v255, 0.0
        %v563 = vsel %vm483, %v256, 0.0
        %v564 = vsel %vm484, %v257, 0.0
        %v565 = vsel %vm485, %v258, 0.0
        %v566 = vsel %vm486, %v259, 0.0
        %v567 = vsel %vm487, %v260, 0.0
        %v568 = vsel %vm488, %v261, 0.0
        %v569 = vsel %vm489, %v262, 0.0
        %v570 = vsel %vm490, %v263, 0.0
        %v571 = vsel %vm491, %v264, 0.0
        %v572 = vsel %vm492, %v265, 0.0
        %v573 = vsel %vm493, %v266, 0.0
        %v574 = vsel %vm494, %v267, 0.0
        %v575 = vsel %vm495, %v268, 0.0
        %v576 = vsel %vm496, %v269, 0.0
        %v577 = vsel %vm497, %v270, 0.0
        %v578 = vsel %vm498, %v271, 0.0
        %v579 = vsel %vm483, %v272, 0.0
        %v580 = vsel %vm484, %v273, 0.0
        %v581 = vsel %vm485, %v274, 0.0
        %v582 = vsel %vm486, %v275, 0.0
        %v583 = vsel %vm487, %v276, 0.0
        %v584 = vsel %vm488, %v277, 0.0
        %v585 = vsel %vm489, %v278, 0.0
        %v586 = vsel %vm490, %v279, 0.0
        %v587 = vsel %vm491, %v280, 0.0
        %v588 = vsel %vm492, %v281, 0.0
        %v589 = vsel %vm493, %v282, 0.0
        %v590 = vsel %vm494, %v283, 0.0
        %v591 = vsel %vm495, %v284, 0.0
        %v592 = vsel %vm496, %v285, 0.0
        %v593 = vsel %vm497, %v286, 0.0
        %v594 = vsel %vm498, %v287, 0.0
        %v595 = vsel %vm483, %v288, 0.0
        %v596 = vsel %vm484, %v289, 0.0
        %v597 = vsel %vm485, %v290, 0.0
        %v598 = vsel %vm486, %v291, 0.0
        %v599 = vsel %vm487, %v292, 0.0
        %v600 = vsel %vm488, %v293, 0.0
        %v601 = vsel %vm489, %v294, 0.0
        %v602 = vsel %vm490, %v295, 0.0
        %v603 = vsel %vm491, %v296, 0.0
        %v604 = vsel %vm492, %v297, 0.0
        %v605 = vsel %vm493, %v298, 0.0
        %v606 = vsel %vm494, %v299, 0.0
        %v607 = vsel %vm495, %v300, 0.0
        %v608 = vsel %vm496, %v301, 0.0
        %v609 = vsel %vm497, %v302, 0.0
        %v610 = vsel %vm498, %v303, 0.0
        %v611 = vsel %vm483, %v304, 0.0
        %v612 = vsel %vm484, %v305, 0.0
        %v613 = vsel %vm485, %v306, 0.0
        %v614 = vsel %vm486, %v307, 0.0
        %v615 = vsel %vm487, %v308, 0.0
        %v616 = vsel %vm488, %v309, 0.0
        %v617 = vsel %vm489, %v310, 0.0
        %v618 = vsel %vm490, %v311, 0.0
        %v619 = vsel %vm491, %v312, 0.0
        %v620 = vsel %vm492, %v313, 0.0
        %v621 = vsel %vm493, %v314, 0.0
        %v622 = vsel %vm494, %v315, 0.0
        %v623 = vsel %vm495, %v316, 0.0
        %v624 = vsel %vm496, %v317, 0.0
        %v625 = vsel %vm497, %v318, 0.0
        %v626 = vsel %vm498, %v319, 0.0
        %v627 = vsel %vm483, %v320, 0.0
        %v628 = vsel %vm484, %v321, 0.0
        %v629 = vsel %vm485, %v322, 0.0
        %v630 = vsel %vm486, %v323, 0.0
        %v631 = vsel %vm487, %v324, 0.0
        %v632 = vsel %vm488, %v325, 0.0
        %v633 = vsel %vm489, %v326, 0.0
        %v634 = vsel %vm490, %v327, 0.0
        %v635 = vsel %vm491, %v328, 0.0
        %v636 = vsel %vm492, %v329, 0.0
        %v637 = vsel %vm493, %v330, 0.0
        %v638 = vsel %vm494, %v331, 0.0
        %v639 = vsel %vm495, %v332, 0.0
        %v640 = vsel %vm496, %v333, 0.0
        %v641 = vsel %vm497, %v334, 0.0
        %v642 = vsel %vm498, %v335, 0.0
        %v643 = vsel %vm483, %v336, 0.0
        %v644 = vsel %vm484, %v337, 0.0
        %v645 = vsel %vm485, %v338, 0.0
        %v646 = vsel %vm486, %v339, 0.0
        %v647 = vsel %vm487, %v340, 0.0
        %v648 = vsel %vm488, %v341, 0.0
        %v649 = vsel %vm489, %v342, 0.0
        %v650 = vsel %vm490, %v343, 0.0
        %v651 = vsel %vm491, %v344, 0.0
        %v652 = vsel %vm492, %v345, 0.0
        %v653 = vsel %vm493, %v346, 0.0
        %v654 = vsel %vm494, %v347, 0.0
        %v655 = vsel %vm495, %v348, 0.0
        %v656 = vsel %vm496, %v349, 0.0
        %v657 = vsel %vm497, %v350, 0.0
        %v658 = vsel %vm498, %v351, 0.0
        %v659 = vsel %vm483, %v352, 0.0
        %v660 = vsel %vm484, %v353, 0.0
        %v661 = vsel %vm485, %v354, 0.0
        %v662 = vsel %vm486, %v355, 0.0
        %v663 = vsel %vm487, %v356, 0.0
        %v664 = vsel %vm488, %v357, 0.0
        %v665 = vsel %vm489, %v358, 0.0
        %v666 = vsel %vm490, %v359, 0.0
        %v667 = vsel %vm491, %v360, 0.0
        %v668 = vsel %vm492, %v361, 0.0
        %v669 = vsel %vm493, %v362, 0.0
        %v670 = vsel %vm494, %v363, 0.0
        %v671 = vsel %vm495, %v364, 0.0
        %v672 = vsel %vm496, %v365, 0.0
        %v673 = vsel %vm497, %v366, 0.0
        %v674 = vsel %vm498, %v367, 0.0
        %v675 = vsel %vm483, %v368, 0.0
        %v676 = vsel %vm484, %v369, 0.0
        %v677 = vsel %vm485, %v370, 0.0
        %v678 = vsel %vm486, %v371, 0.0
        %v679 = vsel %vm487, %v372, 0.0
        %v680 = vsel %vm488, %v373, 0.0
        %v681 = vsel %vm489, %v374, 0.0
        %v682 = vsel %vm490, %v375, 0.0
        %v683 = vsel %vm491, %v376, 0.0
        %v684 = vsel %vm492, %v377, 0.0
        %v685 = vsel %vm493, %v378, 0.0
        %v686 = vsel %vm494, %v379, 0.0
        %v687 = vsel %vm495, %v380, 0.0
        %v688 = vsel %vm496, %v381, 0.0
        %v689 = vsel %vm497, %v382, 0.0
        %v690 = vsel %vm498, %v383, 0.0
        %v691 = vsel %vm483, %v384, 0.0
        %v692 = vsel %vm484, %v385, 0.0
        %v693 = vsel %vm485, %v386, 0.0
        %v694 = vsel %vm486, %v387, 0.0
        %v695 = vsel %vm487, %v388, 0.0
        %v696 = vsel %vm488, %v389, 0.0
        %v697 = vsel %vm489, %v390, 0.0
        %v698 = vsel %vm490, %v391, 0.0
        %v699 = vsel %vm491, %v392, 0.0
        %v700 = vsel %vm492, %v393, 0.0
        %v701 = vsel %vm493, %v394, 0.0
        %v702 = vsel %vm494, %v395, 0.0
        %v703 = vsel %vm495, %v396, 0.0
        %v704 = vsel %vm496, %v397, 0.0
        %v705 = vsel %vm497, %v398, 0.0
        %v706 = vsel %vm498, %v399, 0.0
        %v707 = vsel %vm483, %v400, 0.0
        %v708 = vsel %vm484, %v401, 0.0
        %v709 = vsel %vm485, %v402, 0.0
        %v710 = vsel %vm486, %v403, 0.0
        %v711 = vsel %vm487, %v404, 0.0
        %v712 = vsel %vm488, %v405, 0.0
        %v713 = vsel %vm489, %v406, 0.0
        %v714 = vsel %vm490, %v407, 0.0
        %v715 = vsel %vm491, %v408, 0.0
        %v716 = vsel %vm492, %v409, 0.0
        %v717 = vsel %vm493, %v410, 0.0
        %v718 = vsel %vm494, %v411, 0.0
        %v719 = vsel %vm495, %v412, 0.0
        %v720 = vsel %vm496, %v413, 0.0
        %v721 = vsel %vm497, %v414, 0.0
        %v722 = vsel %vm498, %v415, 0.0
        %v723 = vsel %vm483, %v416, 0.0
        %v724 = vsel %vm484, %v417, 0.0
        %v725 = vsel %vm485, %v418, 0.0
        %v726 = vsel %vm486, %v419, 0.0
        %v727 = vsel %vm487, %v420, 0.0
        %v728 = vsel %vm488, %v421, 0.0
        %v729 = vsel %vm489, %v422, 0.0
        %v730 = vsel %vm490, %v423, 0.0
        %v731 = vsel %vm491, %v424, 0.0
        %v732 = vsel %vm492, %v425, 0.0
        %v733 = vsel %vm493, %v426, 0.0
        %v734 = vsel %vm494, %v427, 0.0
        %v735 = vsel %vm495, %v428, 0.0
        %v736 = vsel %vm496, %v429, 0.0
        %v737 = vsel %vm497, %v430, 0.0
        %v738 = vsel %vm498, %v431, 0.0
        %v739 = vsel %vm483, %v432, 0.0
        %v740 = vsel %vm484, %v433, 0.0
        %v741 = vsel %vm485, %v434, 0.0
        %v742 = vsel %vm486, %v435, 0.0
        %v743 = vsel %vm487, %v436, 0.0
        %v744 = vsel %vm488, %v437, 0.0
        %v745 = vsel %vm489, %v438, 0.0
        %v746 = vsel %vm490, %v439, 0.0
        %v747 = vsel %vm491, %v440, 0.0
        %v748 = vsel %vm492, %v441, 0.0
        %v749 = vsel %vm493, %v442, 0.0
        %v750 = vsel %vm494, %v443, 0.0
        %v751 = vsel %vm495, %v444, 0.0
        %v752 = vsel %vm496, %v445, 0.0
        %v753 = vsel %vm497, %v446, 0.0
        %v754 = vsel %vm498, %v447, 0.0
        %v755 = vld [vmem:[#allocation2] sm:$0xff]
        %v756 = vld [vmem:[#allocation2 + $0x8] sm:$0xff]
        %v757 = vld [vmem:[#allocation2 + $0x10] sm:$0xff]
        %v758 = vld [vmem:[#allocation2 + $0x18] sm:$0xff]
        %v759 = vld [vmem:[#allocation2 + $0x20] sm:$0xff]
        %v760 = vld [vmem:[#allocation2 + $0x28] sm:$0xff]
        %v761 = vld [vmem:[#allocation2 + $0x30] sm:$0xff]
        %v762 = vld [vmem:[#allocation2 + $0x38] sm:$0xff]
        %v763 = vld [vmem:[#allocation2 + $0x40] sm:$0xff]
        %v764 = vld [vmem:[#allocation2 + $0x48] sm:$0xff]
        %v765 = vld [vmem:[#allocation2 + $0x50] sm:$0xff]
        %v766 = vld [vmem:[#allocation2 + $0x58] sm:$0xff]
        %v767 = vld [vmem:[#allocation2 + $0x60] sm:$0xff]
        %v768 = vld [vmem:[#allocation2 + $0x68] sm:$0xff]
        %v769 = vld [vmem:[#allocation2 + $0x70] sm:$0xff]
        %v770 = vld [vmem:[#allocation2 + $0x78] sm:$0xff]
        %v771 = vadd.f32 %v499, %v500
        %v772 = vadd.f32 %v771, %v501
        %v773 = vadd.f32 %v772, %v502
        %v774 = vadd.f32 %v773, %v503
        %v775 = vadd.f32 %v774, %v504
        %v776 = vadd.f32 %v775, %v505
        %v777 = vadd.f32 %v776, %v506
        %v778 = vadd.f32 %v777, %v507
        %v779 = vadd.f32 %v778, %v508
        %v780 = vadd.f32 %v779, %v509
        %v781 = vadd.f32 %v780, %v510
        %v782 = vadd.f32 %v781, %v511
        %v783 = vadd.f32 %v782, %v512
        %v784 = vadd.f32 %v783, %v513
        %v785 = vadd.f32 %v784, %v514
        %786 = vadd.xlane.f32.xlu0 %v785
        %v787 = vpop.xlane.xlu0 %786
        %v788 = vadd.f32 %v515, %v516
        %v789 = vadd.f32 %v788, %v517
        %v790 = vadd.f32 %v789, %v518
        %v791 = vadd.f32 %v790, %v519
        %v792 = vadd.f32 %v791, %v520
        %v793 = vadd.f32 %v792, %v521
        %v794 = vadd.f32 %v793, %v522
        %v795 = vadd.f32 %v794, %v523
        %v796 = vadd.f32 %v795, %v524
        %v797 = vadd.f32 %v796, %v525
        %v798 = vadd.f32 %v797, %v526
        %v799 = vadd.f32 %v798, %v527
        %v800 = vadd.f32 %v799, %v528
        %v801 = vadd.f32 %v800, %v529
        %v802 = vadd.f32 %v801, %v530
        %803 = vadd.xlane.f32.xlu0 %v802
        %v804 = vpop.xlane.xlu0 %803
        %v805 = vadd.f32 %v531, %v532
        %v806 = vadd.f32 %v805, %v533
        %v807 = vadd.f32 %v806, %v534
        %v808 = vadd.f32 %v807, %v535
        %v809 = vadd.f32 %v808, %v536
        %v810 = vadd.f32 %v809, %v537
        %v811 = vadd.f32 %v810, %v538
        %v812 = vadd.f32 %v811, %v539
        %v813 = vadd.f32 %v812, %v540
        %v814 = vadd.f32 %v813, %v541
        %v815 = vadd.f32 %v814, %v542
        %v816 = vadd.f32 %v815, %v543
        %v817 = vadd.f32 %v816, %v544
        %v818 = vadd.f32 %v817, %v545
        %v819 = vadd.f32 %v818, %v546
        %820 = vadd.xlane.f32.xlu0 %v819
        %v821 = vpop.xlane.xlu0 %820
        %v822 = vadd.f32 %v547, %v548
        %v823 = vadd.f32 %v822, %v549
        %v824 = vadd.f32 %v823, %v550
        %v825 = vadd.f32 %v824, %v551
        %v826 = vadd.f32 %v825, %v552
        %v827 = vadd.f32 %v826, %v553
        %v828 = vadd.f32 %v827, %v554
        %v829 = vadd.f32 %v828, %v555
        %v830 = vadd.f32 %v829, %v556
        %v831 = vadd.f32 %v830, %v557
        %v832 = vadd.f32 %v831, %v558
        %v833 = vadd.f32 %v832, %v559
        %v834 = vadd.f32 %v833, %v560
        %v835 = vadd.f32 %v834, %v561
        %v836 = vadd.f32 %v835, %v562
        %837 = vadd.xlane.f32.xlu0 %v836
        %v838 = vpop.xlane.xlu0 %837
        %v839 = vadd.f32 %v563, %v564
        %v840 = vadd.f32 %v839, %v565
        %v841 = vadd.f32 %v840, %v566
        %v842 = vadd.f32 %v841, %v567
        %v843 = vadd.f32 %v842, %v568
        %v844 = vadd.f32 %v843, %v569
        %v845 = vadd.f32 %v844, %v570
        %v846 = vadd.f32 %v845, %v571
        %v847 = vadd.f32 %v846, %v572
        %v848 = vadd.f32 %v847, %v573
        %v849 = vadd.f32 %v848, %v574
        %v850 = vadd.f32 %v849, %v575
        %v851 = vadd.f32 %v850, %v576
        %v852 = vadd.f32 %v851, %v577
        %v853 = vadd.f32 %v852, %v578
        %854 = vadd.xlane.f32.xlu0 %v853
        %v855 = vpop.xlane.xlu0 %854
        %v856 = vadd.f32 %v579, %v580
        %v857 = vadd.f32 %v856, %v581
        %v858 = vadd.f32 %v857, %v582
        %v859 = vadd.f32 %v858, %v583
        %v860 = vadd.f32 %v859, %v584
        %v861 = vadd.f32 %v860, %v585
        %v862 = vadd.f32 %v861, %v586
        %v863 = vadd.f32 %v862, %v587
        %v864 = vadd.f32 %v863, %v588
        %v865 = vadd.f32 %v864, %v589
        %v866 = vadd.f32 %v865, %v590
        %v867 = vadd.f32 %v866, %v591
        %v868 = vadd.f32 %v867, %v592
        %v869 = vadd.f32 %v868, %v593
        %v870 = vadd.f32 %v869, %v594
        %871 = vadd.xlane.f32.xlu0 %v870
        %v872 = vpop.xlane.xlu0 %871
        %v873 = vadd.f32 %v595, %v596
        %v874 = vadd.f32 %v873, %v597
        %v875 = vadd.f32 %v874, %v598
        %v876 = vadd.f32 %v875, %v599
        %v877 = vadd.f32 %v876, %v600
        %v878 = vadd.f32 %v877, %v601
        %v879 = vadd.f32 %v878, %v602
        %v880 = vadd.f32 %v879, %v603
        %v881 = vadd.f32 %v880, %v604
        %v882 = vadd.f32 %v881, %v605
        %v883 = vadd.f32 %v882, %v606
        %v884 = vadd.f32 %v883, %v607
        %v885 = vadd.f32 %v884, %v608
        %v886 = vadd.f32 %v885, %v609
        %v887 = vadd.f32 %v886, %v610
        %888 = vadd.xlane.f32.xlu0 %v887
        %v889 = vpop.xlane.xlu0 %888
        %v890 = vadd.f32 %v611, %v612
        %v891 = vadd.f32 %v890, %v613
        %v892 = vadd.f32 %v891, %v614
        %v893 = vadd.f32 %v892, %v615
        %v894 = vadd.f32 %v893, %v616
        %v895 = vadd.f32 %v894, %v617
        %v896 = vadd.f32 %v895, %v618
        %v897 = vadd.f32 %v896, %v619
        %v898 = vadd.f32 %v897, %v620
        %v899 = vadd.f32 %v898, %v621
        %v900 = vadd.f32 %v899, %v622
        %v901 = vadd.f32 %v900, %v623
        %v902 = vadd.f32 %v901, %v624
        %v903 = vadd.f32 %v902, %v625
        %v904 = vadd.f32 %v903, %v626
        %905 = vadd.xlane.f32.xlu0 %v904
        %v906 = vpop.xlane.xlu0 %905
        %v907 = vadd.f32 %v627, %v628
        %v908 = vadd.f32 %v907, %v629
        %v909 = vadd.f32 %v908, %v630
        %v910 = vadd.f32 %v909, %v631
        %v911 = vadd.f32 %v910, %v632
        %v912 = vadd.f32 %v911, %v633
        %v913 = vadd.f32 %v912, %v634
        %v914 = vadd.f32 %v913, %v635
        %v915 = vadd.f32 %v914, %v636
        %v916 = vadd.f32 %v915, %v637
        %v917 = vadd.f32 %v916, %v638
        %v918 = vadd.f32 %v917, %v639
        %v919 = vadd.f32 %v918, %v640
        %v920 = vadd.f32 %v919, %v641
        %v921 = vadd.f32 %v920, %v642
        %922 = vadd.xlane.f32.xlu0 %v921
        %v923 = vpop.xlane.xlu0 %922
        %v924 = vadd.f32 %v643, %v644
        %v925 = vadd.f32 %v924, %v645
        %v926 = vadd.f32 %v925, %v646
        %v927 = vadd.f32 %v926, %v647
        %v928 = vadd.f32 %v927, %v648
        %v929 = vadd.f32 %v928, %v649
        %v930 = vadd.f32 %v929, %v650
        %v931 = vadd.f32 %v930, %v651
        %v932 = vadd.f32 %v931, %v652
        %v933 = vadd.f32 %v932, %v653
        %v934 = vadd.f32 %v933, %v654
        %v935 = vadd.f32 %v934, %v655
        %v936 = vadd.f32 %v935, %v656
        %v937 = vadd.f32 %v936, %v657
        %v938 = vadd.f32 %v937, %v658
        %939 = vadd.xlane.f32.xlu0 %v938
        %v940 = vpop.xlane.xlu0 %939
        %v941 = vadd.f32 %v659, %v660
        %v942 = vadd.f32 %v941, %v661
        %v943 = vadd.f32 %v942, %v662
        %v944 = vadd.f32 %v943, %v663
        %v945 = vadd.f32 %v944, %v664
        %v946 = vadd.f32 %v945, %v665
        %v947 = vadd.f32 %v946, %v666
        %v948 = vadd.f32 %v947, %v667
        %v949 = vadd.f32 %v948, %v668
        %v950 = vadd.f32 %v949, %v669
        %v951 = vadd.f32 %v950, %v670
        %v952 = vadd.f32 %v951, %v671
        %v953 = vadd.f32 %v952, %v672
        %v954 = vadd.f32 %v953, %v673
        %v955 = vadd.f32 %v954, %v674
        %956 = vadd.xlane.f32.xlu0 %v955
        %v957 = vpop.xlane.xlu0 %956
        %v958 = vadd.f32 %v675, %v676
        %v959 = vadd.f32 %v958, %v677
        %v960 = vadd.f32 %v959, %v678
        %v961 = vadd.f32 %v960, %v679
        %v962 = vadd.f32 %v961, %v680
        %v963 = vadd.f32 %v962, %v681
        %v964 = vadd.f32 %v963, %v682
        %v965 = vadd.f32 %v964, %v683
        %v966 = vadd.f32 %v965, %v684
        %v967 = vadd.f32 %v966, %v685
        %v968 = vadd.f32 %v967, %v686
        %v969 = vadd.f32 %v968, %v687
        %v970 = vadd.f32 %v969, %v688
        %v971 = vadd.f32 %v970, %v689
        %v972 = vadd.f32 %v971, %v690
        %973 = vadd.xlane.f32.xlu0 %v972
        %v974 = vpop.xlane.xlu0 %973
        %v975 = vadd.f32 %v691, %v692
        %v976 = vadd.f32 %v975, %v693
        %v977 = vadd.f32 %v976, %v694
        %v978 = vadd.f32 %v977, %v695
        %v979 = vadd.f32 %v978, %v696
        %v980 = vadd.f32 %v979, %v697
        %v981 = vadd.f32 %v980, %v698
        %v982 = vadd.f32 %v981, %v699
        %v983 = vadd.f32 %v982, %v700
        %v984 = vadd.f32 %v983, %v701
        %v985 = vadd.f32 %v984, %v702
        %v986 = vadd.f32 %v985, %v703
        %v987 = vadd.f32 %v986, %v704
        %v988 = vadd.f32 %v987, %v705
        %v989 = vadd.f32 %v988, %v706
        %990 = vadd.xlane.f32.xlu0 %v989
        %v991 = vpop.xlane.xlu0 %990
        %v992 = vadd.f32 %v707, %v708
        %v993 = vadd.f32 %v992, %v709
        %v994 = vadd.f32 %v993, %v710
        %v995 = vadd.f32 %v994, %v711
        %v996 = vadd.f32 %v995, %v712
        %v997 = vadd.f32 %v996, %v713
        %v998 = vadd.f32 %v997, %v714
        %v999 = vadd.f32 %v998, %v715
        %v1000 = vadd.f32 %v999, %v716
        %v1001 = vadd.f32 %v1000, %v717
        %v1002 = vadd.f32 %v1001, %v718
        %v1003 = vadd.f32 %v1002, %v719
        %v1004 = vadd.f32 %v1003, %v720
        %v1005 = vadd.f32 %v1004, %v721
        %v1006 = vadd.f32 %v1005, %v722
        %1007 = vadd.xlane.f32.xlu0 %v1006
        %v1008 = vpop.xlane.xlu0 %1007
        %v1009 = vadd.f32 %v723, %v724
        %v1010 = vadd.f32 %v1009, %v725
        %v1011 = vadd.f32 %v1010, %v726
        %v1012 = vadd.f32 %v1011, %v727
        %v1013 = vadd.f32 %v1012, %v728
        %v1014 = vadd.f32 %v1013, %v729
        %v1015 = vadd.f32 %v1014, %v730
        %v1016 = vadd.f32 %v1015, %v731
        %v1017 = vadd.f32 %v1016, %v732
        %v1018 = vadd.f32 %v1017, %v733
        %v1019 = vadd.f32 %v1018, %v734
        %v1020 = vadd.f32 %v1019, %v735
        %v1021 = vadd.f32 %v1020, %v736
        %v1022 = vadd.f32 %v1021, %v737
        %v1023 = vadd.f32 %v1022, %v738
        %1024 = vadd.xlane.f32.xlu0 %v1023
        %v1025 = vpop.xlane.xlu0 %1024
        %v1026 = vadd.f32 %v739, %v740
        %v1027 = vadd.f32 %v1026, %v741
        %v1028 = vadd.f32 %v1027, %v742
        %v1029 = vadd.f32 %v1028, %v743
        %v1030 = vadd.f32 %v1029, %v744
        %v1031 = vadd.f32 %v1030, %v745
        %v1032 = vadd.f32 %v1031, %v746
        %v1033 = vadd.f32 %v1032, %v747
        %v1034 = vadd.f32 %v1033, %v748
        %v1035 = vadd.f32 %v1034, %v749
        %v1036 = vadd.f32 %v1035, %v750
        %v1037 = vadd.f32 %v1036, %v751
        %v1038 = vadd.f32 %v1037, %v752
        %v1039 = vadd.f32 %v1038, %v753
        %v1040 = vadd.f32 %v1039, %v754
        %1041 = vadd.xlane.f32.xlu0 %v1040
        %v1042 = vpop.xlane.xlu0 %1041
        %v1043 = vadd.f32 %v755, %v787
        %v1044 = vadd.f32 %v756, %v804
        %v1045 = vadd.f32 %v757, %v821
        %v1046 = vadd.f32 %v758, %v838
        %v1047 = vadd.f32 %v759, %v855
        %v1048 = vadd.f32 %v760, %v872
        %v1049 = vadd.f32 %v761, %v889
        %v1050 = vadd.f32 %v762, %v906
        %v1051 = vadd.f32 %v763, %v923
        %v1052 = vadd.f32 %v764, %v940
        %v1053 = vadd.f32 %v765, %v957
        %v1054 = vadd.f32 %v766, %v974
        %v1055 = vadd.f32 %v767, %v991
        %v1056 = vadd.f32 %v768, %v1008
        %v1057 = vadd.f32 %v769, %v1025
        %v1058 = vadd.f32 %v770, %v1042
        %vm1059 = vcmask 7168
        %1060 = vst.msk [vmem:[#allocation2] sm:$0xff] %vm1059, %v1043
        %1061 = vst.msk [vmem:[#allocation2 + $0x8] sm:$0xff] %vm1059, %v1044
        %1062 = vst.msk [vmem:[#allocation2 + $0x10] sm:$0xff] %vm1059, %v1045
        %1063 = vst.msk [vmem:[#allocation2 + $0x18] sm:$0xff] %vm1059, %v1046
        %1064 = vst.msk [vmem:[#allocation2 + $0x20] sm:$0xff] %vm1059, %v1047
        %1065 = vst.msk [vmem:[#allocation2 + $0x28] sm:$0xff] %vm1059, %v1048
        %1066 = vst.msk [vmem:[#allocation2 + $0x30] sm:$0xff] %vm1059, %v1049
        %1067 = vst.msk [vmem:[#allocation2 + $0x38] sm:$0xff] %vm1059, %v1050
        %1068 = vst.msk [vmem:[#allocation2 + $0x40] sm:$0xff] %vm1059, %v1051
        %1069 = vst.msk [vmem:[#allocation2 + $0x48] sm:$0xff] %vm1059, %v1052
        %1070 = vst.msk [vmem:[#allocation2 + $0x50] sm:$0xff] %vm1059, %v1053
        %1071 = vst.msk [vmem:[#allocation2 + $0x58] sm:$0xff] %vm1059, %v1054
        %1072 = vst.msk [vmem:[#allocation2 + $0x60] sm:$0xff] %vm1059, %v1055
        %1073 = vst.msk [vmem:[#allocation2 + $0x68] sm:$0xff] %vm1059, %v1056
        %1074 = vst.msk [vmem:[#allocation2 + $0x70] sm:$0xff] %vm1059, %v1057
        %1075 = vst.msk [vmem:[#allocation2 + $0x78] sm:$0xff] %vm1059, %v1058
        %p1076 = scmp.eq.s32.totalorder %s20, 1
        // Predicated region
        $region33: #{_global_avg_pool_rows.1} parent=23 // pred_check
          %p1077 = pneg %p1076
        $region34: #{_global_avg_pool_rows.1} parent=23 // pred_check_branch
          %1079 = sbr.rel (%p1077) target = $region36
        $region35: #{_global_avg_pool_rows.1} parent=23 // pred_region
          %v1080 = vld [vmem:[#allocation2] sm:$0xff]
          %v1081 = vld [vmem:[#allocation2 + $0x8] sm:$0xff]
          %v1082 = vld [vmem:[#allocation2 + $0x10] sm:$0xff]
          %v1083 = vld [vmem:[#allocation2 + $0x18] sm:$0xff]
          %v1084 = vld [vmem:[#allocation2 + $0x20] sm:$0xff]
          %v1085 = vld [vmem:[#allocation2 + $0x28] sm:$0xff]
          %v1086 = vld [vmem:[#allocation2 + $0x30] sm:$0xff]
          %v1087 = vld [vmem:[#allocation2 + $0x38] sm:$0xff]
          %v1088 = vld [vmem:[#allocation2 + $0x40] sm:$0xff]
          %v1089 = vld [vmem:[#allocation2 + $0x48] sm:$0xff]
          %v1090 = vld [vmem:[#allocation2 + $0x50] sm:$0xff]
          %v1091 = vld [vmem:[#allocation2 + $0x58] sm:$0xff]
          %v1092 = vld [vmem:[#allocation2 + $0x60] sm:$0xff]
          %v1093 = vld [vmem:[#allocation2 + $0x68] sm:$0xff]
          %v1094 = vld [vmem:[#allocation2 + $0x70] sm:$0xff]
          %v1095 = vld [vmem:[#allocation2 + $0x78] sm:$0xff]
          %v1096 = vmul.f32 %v1080, 0.00043402778
          %v1097 = vmul.f32 %v1081, 0.00043402778
          %v1098 = vmul.f32 %v1082, 0.00043402778
          %v1099 = vmul.f32 %v1083, 0.00043402778
          %v1100 = vmul.f32 %v1084, 0.00043402778
          %v1101 = vmul.f32 %v1085, 0.00043402778
          %v1102 = vmul.f32 %v1086, 0.00043402778
          %v1103 = vmul.f32 %v1087, 0.00043402778
          %v1104 = vmul.f32 %v1088, 0.00043402778
          %v1105 = vmul.f32 %v1089, 0.00043402778
          %v1106 = vmul.f32 %v1090, 0.00043402778
          %v1107 = vmul.f32 %v1091, 0.00043402778
          %v1108 = vmul.f32 %v1092, 0.00043402778
          %v1109 = vmul.f32 %v1093, 0.00043402778
          %v1110 = vmul.f32 %v1094, 0.00043402778
          %v1111 = vmul.f32 %v1095, 0.00043402778
          %1112 = vst.msk [vmem:[%s169] sm:$0xff] %vm1059, %v1096
          %1113 = vst.msk [vmem:[%s169 + $0x8] sm:$0xff] %vm1059, %v1097
          %1114 = vst.msk [vmem:[%s169 + $0x10] sm:$0xff] %vm1059, %v1098
          %1115 = vst.msk [vmem:[%s169 + $0x18] sm:$0xff] %vm1059, %v1099
          %1116 = vst.msk [vmem:[%s169 + $0x20] sm:$0xff] %vm1059, %v1100
          %1117 = vst.msk [vmem:[%s169 + $0x28] sm:$0xff] %vm1059, %v1101
          %1118 = vst.msk [vmem:[%s169 + $0x30] sm:$0xff] %vm1059, %v1102
          %1119 = vst.msk [vmem:[%s169 + $0x38] sm:$0xff] %vm1059, %v1103
          %1120 = vst.msk [vmem:[%s169 + $0x40] sm:$0xff] %vm1059, %v1104
          %1121 = vst.msk [vmem:[%s169 + $0x48] sm:$0xff] %vm1059, %v1105
          %1122 = vst.msk [vmem:[%s169 + $0x50] sm:$0xff] %vm1059, %v1106
          %1123 = vst.msk [vmem:[%s169 + $0x58] sm:$0xff] %vm1059, %v1107
          %1124 = vst.msk [vmem:[%s169 + $0x60] sm:$0xff] %vm1059, %v1108
          %1125 = vst.msk [vmem:[%s169 + $0x68] sm:$0xff] %vm1059, %v1109
          %1126 = vst.msk [vmem:[%s169 + $0x70] sm:$0xff] %vm1059, %v1110
          %1127 = vst.msk [vmem:[%s169 + $0x78] sm:$0xff] %vm1059, %v1111
        $region36: #{_global_avg_pool_rows.1} parent=23 // pred_fallthru
          _
        %s1128 = smul.u32 16, %s19
        %p1129 = scmp.lt.s32.totalorder %s1128, 15
        %s1130 = scalar_select %p1129, %s1128, 15
        %s1131 = smul.addr %s1130, 8
        %s1132 = scalar_lea.vmem %s1, %s1131
        // Predicated region
        $region37: #{_global_avg_pool_rows.1} parent=23 // pred_check
          %p1133 = pneg %p73
        $region38: #{_global_avg_pool_rows.1} parent=23 // pred_check_branch
          %1135 = sbr.rel (%p1133) target = $region40
        $region39: #{_global_avg_pool_rows.1} parent=23 // pred_region
          %s1136 = smul.u32 16, %s19
        $region40: #{_global_avg_pool_rows.1} parent=23 // pred_fallthru
          _
        // Predicated region
        $region41: #{_global_avg_pool_rows.1} parent=23 // pred_check
          %p1137 = pneg %p73
        $region42: #{_global_avg_pool_rows.1} parent=23 // pred_check_branch
          %1139 = sbr.rel (%p1137) target = $region44
        $region43: #{_global_avg_pool_rows.1} parent=23 // pred_region
          %s1140 = smul.u32 16, %s19
          %p1141 = scmp.lt.s32.totalorder %s1140, 15
          %s1142 = scalar_select %p1141, %s1140, 15
          %s1143 = smul.addr %s1142, 8
          %s1144 = scalar_lea.vmem %s1, %s1143
        $region44: #{_global_avg_pool_rows.1} parent=23 // pred_fallthru
          _
      $region24: #{_global_avg_pool_rows.1} parent=5 // pred_fallthru
        _
      %p1145 = scmp.le.s32.totalorder 2, %s10
      // Predicated region
      $region45: #{_global_avg_pool_rows.1} parent=5 // pred_check
        %p1146 = pneg %p1145
      $region46: #{_global_avg_pool_rows.1} parent=5 // pred_check_branch
        %1148 = sbr.rel (%p1146) target = $region48
      $region47: #{_global_avg_pool_rows.1} parent=5 // pred_region
        %s1149 = ssub.s32 %s10, 2
      $region48: #{_global_avg_pool_rows.1} parent=5 // pred_fallthru
        _
    $region6: #{_global_avg_pool_rows.1} parent=1 // loop_footer
      %s14 = sadd.s32 1, %s10
    $region7: #{_global_avg_pool_rows.1} parent=1 // loop_footer_branch
      %9 = sbr.rel target = $region3
    $region8: #{_global_avg_pool_rows.1} parent=1 // loop_exit
      _
    %1150 = vsyncpa [#allocation4], 1
    %s1151 = scalar_lea.sflag [#allocation4], 1
    %1152 = vsyncpa %s1151, 1

</llo_original>
